<compile_context>
chip_gen: v6e
topology: v6e:2x2x1
jax: 0.10.0
libtpu: 0.0.40
codegen_flags: <defaults>
</compile_context>

<pallas_src>
from types import SimpleNamespace

import jax
import jax.numpy as jnp
from jax import lax
from jax.experimental import pallas as pl
from jax.experimental.pallas import tpu as pltpu

_LANE = 128
_ROW_ALIGN = 8                       # sublane alignment for a (rows, cols) block
_TARGET_BLOCK_BYTES = 1 << 20        # ~1 MiB per stream per buffer:
                                     # 5 streams x 2 buffers ~= 10 MiB VMEM

_MASK23 = (1 << 23) - 1
_NOISE_SCALE = 0.1 / float(1 << 23)  # 0.1 * U[0,1) folded into one constant


# ---------------------------------------------------------------------------
# slab helpers (glue, plain JAX — no data movement in the common case)
# ---------------------------------------------------------------------------
def _slab_view(x):
    """Lane-dense 2-D view of x. Returns (slab, n_pad). No copy when possible."""
    n = x.size
    if x.ndim >= 2:
        hw = x.shape[-1] * x.shape[-2]
        if hw % _LANE == 0:
            return x.reshape(n // hw, hw), 0
    if n % _LANE == 0:
        return x.reshape(n // _LANE, _LANE), 0
    # Fallback for awkward sizes: pad the flat vector (rare; costs one copy).
    pad_to = -(-n // (_ROW_ALIGN * _LANE)) * (_ROW_ALIGN * _LANE)
    flat = jnp.pad(x.reshape(-1), (0, pad_to - n))
    return flat.reshape(pad_to // _LANE, _LANE), pad_to - n


def _choose_block_rows(rows, cols, itemsize):
    """Largest ~1 MiB block that keeps full-extent legality and an even grid."""
    target = _TARGET_BLOCK_BYTES // (cols * itemsize)
    target = max(_ROW_ALIGN, (target // _ROW_ALIGN) * _ROW_ALIGN)
    if rows <= target:
        return rows                      # single block == full array dims
    block = target
    grid = pl.cdiv(rows, block)
    if grid > 1 and grid % 2:            # even step count: v7x has 2 TensorCores
        alt = -(-(-(-rows // (grid + 1))) // _ROW_ALIGN) * _ROW_ALIGN
        if alt >= _ROW_ALIGN:
            block = alt
    return block


# ---------------------------------------------------------------------------
# Pallas kernel: fused net_mixup (mixup + per-element noise, noise in-kernel)
# ---------------------------------------------------------------------------
def _hash32(x):
    # SplitMix32-style finalizer (VPU: shifts / xors / 32-bit multiplies).
    x = x ^ (x >> 16)
    x = x * jnp.uint32(0x7FEB352D)
    x = x ^ (x >> 15)
    x = x * jnp.uint32(0x846CA68B)
    x = x ^ (x >> 16)
    return x


def _net_mixup_kernel(seed_ref, prob_ref, a_ref, b_ref, ao_ref, bo_ref, mo_ref):
    blk_rows, blk_cols = a_ref.shape
    step = pl.program_id(0)

    seed = seed_ref[0].astype(jnp.uint32)
    prob = prob_ref[0]

    # Global element index -> the noise pattern is independent of the block
    # size / grid partition and of which TensorCore runs the step.
    row = lax.broadcasted_iota(jnp.int32, (blk_rows, blk_cols), 0) + step * blk_rows
    col = lax.broadcasted_iota(jnp.int32, (blk_rows, blk_cols), 1)
    base = (row * blk_cols + col).astype(jnp.uint32) ^ (seed * jnp.uint32(0x9E3779B9))

    def noise(stream_const):
        # TODO(synk): generate_noise distribution is unspecified; 0.1*U[0,1) used.
        h = _hash32(base ^ jnp.uint32(stream_const))
        u = (h & jnp.uint32(_MASK23)).astype(jnp.int32).astype(jnp.float32)
        return u * jnp.float32(_NOISE_SCALE)          # already scaled by 0.1

    # Each output is written immediately so no full-tile temporary stays live
    # across the other streams (keeps vreg pressure / spills down).
    a9 = jnp.float32(0.9) * a_ref[...].astype(jnp.float32)
    ao_ref[...] = (a9 + noise(0x85EBCA6B)).astype(ao_ref.dtype)

    b9 = jnp.float32(0.9) * b_ref[...].astype(jnp.float32)
    bo_ref[...] = (b9 + noise(0xC2B2AE35)).astype(bo_ref.dtype)

    # mixed = prob*a + (1-prob)*b is built from the CLEAN a, b (the PyTorch
    # source calls construct() before the noise loop); the 0.9 scale is folded
    # into the prescaled a9 / b9 terms.
    # TODO(synk): NETMIXUP.construct internals unspecified; linear mixup assumed.
    mo_ref[...] = (prob * a9 + (jnp.float32(1.0) - prob) * b9
                   + noise(0x27D4EB2F)).astype(mo_ref.dtype)


def net_mixup_pallas(a, b, prob, seed):
    shape, dtype, n = a.shape, a.dtype, a.size

    a2d, pad = _slab_view(a)
    b2d, _ = _slab_view(b)
    rows, cols = a2d.shape
    block_rows = _choose_block_rows(rows, cols, a2d.dtype.itemsize)
    grid = pl.cdiv(rows, block_rows)

    tile = pl.BlockSpec((block_rows, cols), lambda i: (i, 0))
    smem = pl.BlockSpec(memory_space=pltpu.MemorySpace.SMEM)
    out_sds = jax.ShapeDtypeStruct((rows, cols), dtype)

    ao, bo, mo = pl.pallas_call(
        _net_mixup_kernel,
        out_shape=(out_sds, out_sds, out_sds),
        grid=(grid,),
        in_specs=[smem, smem, tile, tile],
        out_specs=(tile, tile, tile),
        compiler_params=pltpu.CompilerParams(
            dimension_semantics=("parallel",),
            vmem_limit_bytes=48 * 1024 * 1024,   # headroom on v7x's 64 MiB VMEM
        ),
    )(
        seed.reshape(1).astype(jnp.int32),
        jnp.asarray(prob, jnp.float32).reshape(1),
        a2d,
        b2d,
    )

    if pad:
        return tuple(y.reshape(-1)[:n].reshape(shape) for y in (ao, bo, mo))
    return tuple(y.reshape(shape) for y in (ao, bo, mo))


# ---------------------------------------------------------------------------
# TC module (JAX wrapper)
# ---------------------------------------------------------------------------
class TC:
    def __init__(self, args):
        self.args = args

    def __call__(self, inp, *, key=None):
        args = self.args
        if args.eval_indict in ("acc", "feature_extract"):
            # .cuda() + Variable are no-ops for JAX on TPU; returning the input
            # directly avoids a full HBM read + write for a pure passthrough.
            return inp
        elif args.eval_indict == "loss":
            if args.pt_loss == "net_mixup":
                if key is None:
                    key = jax.random.PRNGKey(0)
                batch = inp.shape[0]
                half = batch // 2
                a = inp[:half]
                b = inp[half:]
                k_prob, k_seed = jax.random.split(key)
                # NETMIXUP(1).gen_prob() ~ Beta(1, 1)
                prob = jax.random.beta(k_prob, 1.0, 1.0)
                seed = jax.random.randint(
                    k_seed, (1,), 0, 2**31 - 1, dtype=jnp.int32)
                a_out, b_out, mixed = net_mixup_pallas(a, b, prob, seed)
                return [a_out, b_out, mixed, prob]
            elif args.pt_loss in ("instance_discriminative", "TemporalDis"):
                return [inp[0], inp[1]]           # device move is a no-op
            elif args.pt_loss == "TSC":
                return jnp.concatenate(inp, axis=0)
            else:
                raise Exception("unsupported method!")
        else:
            raise Exception("unsupported method!")


# ---------------------------------------------------------------------------
# demo / self-check
# ---------------------------------------------------------------------------
if __name__ == "__main__":
    key = jax.random.PRNGKey(0)
    k_in, k_mix = jax.random.split(key)

    # small NCTHW video clip: batch=2, channels=4, time=8, height=16, width=16
    x = jax.random.normal(k_in, (2, 4, 8, 16, 16), dtype=jnp.float32)

    # --- 'acc' branch: pure device passthrough ------------------------------
    tc_acc = TC(SimpleNamespace(eval_indict="acc", pt_loss=None))
    y = tc_acc(x)
    jax.block_until_ready(y)
    assert y.shape == x.shape and bool(jnp.array_equal(y, x))

    # --- 'net_mixup' branch: fused Pallas mixup + in-kernel noise ------------
    tc_mix = TC(SimpleNamespace(eval_indict="loss", pt_loss="net_mixup"))
    a_out, b_out, mixed, prob = tc_mix(x, key=k_mix)
    jax.block_until_ready((a_out, b_out, mixed, prob))

    a_in, b_in = x[:1], x[1:]
    assert a_out.shape == a_in.shape and a_out.dtype == x.dtype
    assert 0.0 <= float(prob) <= 1.0

    # recover the in-kernel noise and check it is in [0, 1) for every tensor
    na = (a_out - 0.9 * a_in) / 0.1
    nb = (b_out - 0.9 * b_in) / 0.1
    nm = (mixed - 0.9 * (prob * a_in + (1.0 - prob) * b_in)) / 0.1
    for nz in (na, nb, nm):
        assert bool(jnp.all(nz >= -1e-3)) and bool(jnp.all(nz <= 1.0 + 1e-3))
    # the three noise draws must be independent, not copies of each other
    assert not bool(jnp.allclose(na, nb)) and not bool(jnp.allclose(na, nm))

    # --- 'TSC' branch: concat passthrough ------------------------------------
    tc_tsc = TC(SimpleNamespace(eval_indict="loss", pt_loss="TSC"))
    z = tc_tsc([x, x])
    jax.block_until_ready(z)
    assert z.shape == (4,) + x.shape[1:]

    print("KERNEL_OK")
</pallas_src>

<mosaic_0001>
module attributes {stable_mosaic.version = 11 : i64} {
  func.func @_net_mixup_kernel(%arg0: i32, %arg1: memref<1xi32, #tpu.memory_space<smem>>, %arg2: memref<1xf32, #tpu.memory_space<smem>>, %arg3: memref<32x256xf32, #tpu.memory_space<vmem>>, %arg4: memref<32x256xf32, #tpu.memory_space<vmem>>, %arg5: memref<32x256xf32, #tpu.memory_space<vmem>>, %arg6: memref<32x256xf32, #tpu.memory_space<vmem>>, %arg7: memref<32x256xf32, #tpu.memory_space<vmem>>) attributes {dimension_semantics = [#tpu.dimension_semantics<parallel>], iteration_bounds = array<i64: 1>, scalar_prefetch = 0 : i64, scratch_operands = 0 : i64, tpu.core_type = #tpu.core_type<tc>, window_params = [{transform_indices = @transform_0, window_bounds = array<i64: 1>}, {transform_indices = @transform_1, window_bounds = array<i64: 1>}, {transform_indices = @transform_2, window_bounds = array<i64: 32, 256>}, {transform_indices = @transform_3, window_bounds = array<i64: 32, 256>}, {transform_indices = @transform_4, window_bounds = array<i64: 32, 256>}, {transform_indices = @transform_5, window_bounds = array<i64: 32, 256>}, {transform_indices = @transform_6, window_bounds = array<i64: 32, 256>}]} {
    %c0 = arith.constant 0 : index
    %0 = memref.load %arg1[%c0] : memref<1xi32, #tpu.memory_space<smem>>
    %c0_0 = arith.constant 0 : index
    %1 = memref.load %arg2[%c0_0] : memref<1xf32, #tpu.memory_space<smem>>
    %2 = tpu.iota {dimensions = array<i32: 0>} : vector<32x256xi32>
    %c32_i32 = arith.constant 32 : i32
    %3 = arith.muli %arg0, %c32_i32 : i32
    %4 = vector.broadcast %3 : i32 to vector<32x256xi32>
    %5 = arith.addi %2, %4 : vector<32x256xi32>
    %6 = tpu.iota {dimensions = array<i32: 1>} : vector<32x256xi32>
    %c256_i32 = arith.constant 256 : i32
    %7 = vector.broadcast %c256_i32 : i32 to vector<32x256xi32>
    %8 = arith.muli %5, %7 : vector<32x256xi32>
    %9 = arith.addi %8, %6 : vector<32x256xi32>
    %c-1640531527_i32 = arith.constant -1640531527 : i32
    %10 = arith.muli %0, %c-1640531527_i32 : i32
    %11 = vector.broadcast %10 : i32 to vector<32x256xi32>
    %12 = arith.xori %9, %11 : vector<32x256xi32>
    %c0_1 = arith.constant 0 : index
    %c0_2 = arith.constant 0 : index
    %13 = vector.load %arg3[%c0_1, %c0_2] : memref<32x256xf32, #tpu.memory_space<vmem>>, vector<32x256xf32>
    %cst = arith.constant 0.899999976 : f32
    %14 = vector.broadcast %cst : f32 to vector<32x256xf32>
    %15 = arith.mulf %14, %13 : vector<32x256xf32>
    %c-2048144789_i32 = arith.constant -2048144789 : i32
    %16 = vector.broadcast %c-2048144789_i32 : i32 to vector<32x256xi32>
    %17 = arith.xori %12, %16 : vector<32x256xi32>
    %c16_i32 = arith.constant 16 : i32
    %18 = vector.broadcast %c16_i32 : i32 to vector<32x256xi32>
    %19 = arith.shrui %17, %18 : vector<32x256xi32>
    %20 = arith.xori %17, %19 : vector<32x256xi32>
    %c2146121005_i32 = arith.constant 2146121005 : i32
    %21 = vector.broadcast %c2146121005_i32 : i32 to vector<32x256xi32>
    %22 = arith.muli %20, %21 : vector<32x256xi32>
    %c15_i32 = arith.constant 15 : i32
    %23 = vector.broadcast %c15_i32 : i32 to vector<32x256xi32>
    %24 = arith.shrui %22, %23 : vector<32x256xi32>
    %25 = arith.xori %22, %24 : vector<32x256xi32>
    %c-2073254261_i32 = arith.constant -2073254261 : i32
    %26 = vector.broadcast %c-2073254261_i32 : i32 to vector<32x256xi32>
    %27 = arith.muli %25, %26 : vector<32x256xi32>
    %c16_i32_3 = arith.constant 16 : i32
    %28 = vector.broadcast %c16_i32_3 : i32 to vector<32x256xi32>
    %29 = arith.shrui %27, %28 : vector<32x256xi32>
    %30 = arith.xori %27, %29 : vector<32x256xi32>
    %c8388607_i32 = arith.constant 8388607 : i32
    %31 = vector.broadcast %c8388607_i32 : i32 to vector<32x256xi32>
    %32 = arith.andi %30, %31 : vector<32x256xi32>
    %33 = arith.sitofp %32 : vector<32x256xi32> to vector<32x256xf32>
    %cst_4 = arith.constant 1.19209291E-8 : f32
    %34 = vector.broadcast %cst_4 : f32 to vector<32x256xf32>
    %35 = arith.mulf %33, %34 : vector<32x256xf32>
    %36 = arith.addf %15, %35 : vector<32x256xf32>
    %c0_5 = arith.constant 0 : index
    %c0_6 = arith.constant 0 : index
    %37 = vector.load %arg5[%c0_5, %c0_6] : memref<32x256xf32, #tpu.memory_space<vmem>>, vector<32x256xf32>
    tpu.vector_store %arg5[%c0_5, %c0_6], %36 {strides = array<i32>} : memref<32x256xf32, #tpu.memory_space<vmem>>, vector<32x256xf32>,
    %c0_7 = arith.constant 0 : index
    %c0_8 = arith.constant 0 : index
    %38 = vector.load %arg4[%c0_7, %c0_8] : memref<32x256xf32, #tpu.memory_space<vmem>>, vector<32x256xf32>
    %cst_9 = arith.constant 0.899999976 : f32
    %39 = vector.broadcast %cst_9 : f32 to vector<32x256xf32>
    %40 = arith.mulf %39, %38 : vector<32x256xf32>
    %c-1028477387_i32 = arith.constant -1028477387 : i32
    %41 = vector.broadcast %c-1028477387_i32 : i32 to vector<32x256xi32>
    %42 = arith.xori %12, %41 : vector<32x256xi32>
    %c16_i32_10 = arith.constant 16 : i32
    %43 = vector.broadcast %c16_i32_10 : i32 to vector<32x256xi32>
    %44 = arith.shrui %42, %43 : vector<32x256xi32>
    %45 = arith.xori %42, %44 : vector<32x256xi32>
    %c2146121005_i32_11 = arith.constant 2146121005 : i32
    %46 = vector.broadcast %c2146121005_i32_11 : i32 to vector<32x256xi32>
    %47 = arith.muli %45, %46 : vector<32x256xi32>
    %c15_i32_12 = arith.constant 15 : i32
    %48 = vector.broadcast %c15_i32_12 : i32 to vector<32x256xi32>
    %49 = arith.shrui %47, %48 : vector<32x256xi32>
    %50 = arith.xori %47, %49 : vector<32x256xi32>
    %c-2073254261_i32_13 = arith.constant -2073254261 : i32
    %51 = vector.broadcast %c-2073254261_i32_13 : i32 to vector<32x256xi32>
    %52 = arith.muli %50, %51 : vector<32x256xi32>
    %c16_i32_14 = arith.constant 16 : i32
    %53 = vector.broadcast %c16_i32_14 : i32 to vector<32x256xi32>
    %54 = arith.shrui %52, %53 : vector<32x256xi32>
    %55 = arith.xori %52, %54 : vector<32x256xi32>
    %c8388607_i32_15 = arith.constant 8388607 : i32
    %56 = vector.broadcast %c8388607_i32_15 : i32 to vector<32x256xi32>
    %57 = arith.andi %55, %56 : vector<32x256xi32>
    %58 = arith.sitofp %57 : vector<32x256xi32> to vector<32x256xf32>
    %cst_16 = arith.constant 1.19209291E-8 : f32
    %59 = vector.broadcast %cst_16 : f32 to vector<32x256xf32>
    %60 = arith.mulf %58, %59 : vector<32x256xf32>
    %61 = arith.addf %40, %60 : vector<32x256xf32>
    %c0_17 = arith.constant 0 : index
    %c0_18 = arith.constant 0 : index
    %62 = vector.load %arg6[%c0_17, %c0_18] : memref<32x256xf32, #tpu.memory_space<vmem>>, vector<32x256xf32>
    tpu.vector_store %arg6[%c0_17, %c0_18], %61 {strides = array<i32>} : memref<32x256xf32, #tpu.memory_space<vmem>>, vector<32x256xf32>,
    %63 = vector.broadcast %1 : f32 to vector<32x256xf32>
    %64 = arith.mulf %63, %15 : vector<32x256xf32>
    %cst_19 = arith.constant 1.000000e+00 : f32
    %65 = arith.subf %cst_19, %1 : f32
    %66 = vector.broadcast %65 : f32 to vector<32x256xf32>
    %67 = arith.mulf %66, %40 : vector<32x256xf32>
    %68 = arith.addf %64, %67 : vector<32x256xf32>
    %c668265263_i32 = arith.constant 668265263 : i32
    %69 = vector.broadcast %c668265263_i32 : i32 to vector<32x256xi32>
    %70 = arith.xori %12, %69 : vector<32x256xi32>
    %c16_i32_20 = arith.constant 16 : i32
    %71 = vector.broadcast %c16_i32_20 : i32 to vector<32x256xi32>
    %72 = arith.shrui %70, %71 : vector<32x256xi32>
    %73 = arith.xori %70, %72 : vector<32x256xi32>
    %c2146121005_i32_21 = arith.constant 2146121005 : i32
    %74 = vector.broadcast %c2146121005_i32_21 : i32 to vector<32x256xi32>
    %75 = arith.muli %73, %74 : vector<32x256xi32>
    %c15_i32_22 = arith.constant 15 : i32
    %76 = vector.broadcast %c15_i32_22 : i32 to vector<32x256xi32>
    %77 = arith.shrui %75, %76 : vector<32x256xi32>
    %78 = arith.xori %75, %77 : vector<32x256xi32>
    %c-2073254261_i32_23 = arith.constant -2073254261 : i32
    %79 = vector.broadcast %c-2073254261_i32_23 : i32 to vector<32x256xi32>
    %80 = arith.muli %78, %79 : vector<32x256xi32>
    %c16_i32_24 = arith.constant 16 : i32
    %81 = vector.broadcast %c16_i32_24 : i32 to vector<32x256xi32>
    %82 = arith.shrui %80, %81 : vector<32x256xi32>
    %83 = arith.xori %80, %82 : vector<32x256xi32>
    %c8388607_i32_25 = arith.constant 8388607 : i32
    %84 = vector.broadcast %c8388607_i32_25 : i32 to vector<32x256xi32>
    %85 = arith.andi %83, %84 : vector<32x256xi32>
    %86 = arith.sitofp %85 : vector<32x256xi32> to vector<32x256xf32>
    %cst_26 = arith.constant 1.19209291E-8 : f32
    %87 = vector.broadcast %cst_26 : f32 to vector<32x256xf32>
    %88 = arith.mulf %86, %87 : vector<32x256xf32>
    %89 = arith.addf %68, %88 : vector<32x256xf32>
    %c0_27 = arith.constant 0 : index
    %c0_28 = arith.constant 0 : index
    %90 = vector.load %arg7[%c0_27, %c0_28] : memref<32x256xf32, #tpu.memory_space<vmem>>, vector<32x256xf32>
    tpu.vector_store %arg7[%c0_27, %c0_28], %89 {strides = array<i32>} : memref<32x256xf32, #tpu.memory_space<vmem>>, vector<32x256xf32>,
    return
  }
  func.func @transform_0(%arg0: i32) -> i32 {
    %c0_i32 = arith.constant 0 : i32
    %c0_i32_0 = arith.constant 0 : i32
    return %c0_i32 : i32
  }
  func.func @transform_1(%arg0: i32) -> i32 {
    %c0_i32 = arith.constant 0 : i32
    %c0_i32_0 = arith.constant 0 : i32
    return %c0_i32 : i32
  }
  func.func @transform_2(%arg0: i32) -> (i32, i32) {
    %c0_i32 = arith.constant 0 : i32
    %c0_i32_0 = arith.constant 0 : i32
    return %arg0, %c0_i32 : i32, i32
  }
  func.func @transform_3(%arg0: i32) -> (i32, i32) {
    %c0_i32 = arith.constant 0 : i32
    %c0_i32_0 = arith.constant 0 : i32
    return %arg0, %c0_i32 : i32, i32
  }
  func.func @transform_4(%arg0: i32) -> (i32, i32) {
    %c0_i32 = arith.constant 0 : i32
    %c0_i32_0 = arith.constant 0 : i32
    return %arg0, %c0_i32 : i32, i32
  }
  func.func @transform_5(%arg0: i32) -> (i32, i32) {
    %c0_i32 = arith.constant 0 : i32
    %c0_i32_0 = arith.constant 0 : i32
    return %arg0, %c0_i32 : i32, i32
  }
  func.func @transform_6(%arg0: i32) -> (i32, i32) {
    %c0_i32 = arith.constant 0 : i32
    %c0_i32_0 = arith.constant 0 : i32
    return %arg0, %c0_i32 : i32, i32
  }
}

</mosaic_0001>

<llo_original>
// kernel: tpu_custom_call.1
$region0: #{tpu_custom_call.1}
  #allocation0 [shape = 'u32[]', space=smem, size = 0x4, offset = 0x4, fixed_abs, tag = 'smem constant byte address 0x4 - core index']
  #allocation1 [shape = 'u32[144,128]{1,0:T(1,128)}', space=vmem, size = 0x12000, scoped, tag = 'internal scratch']
  #allocation2 [shape = 's32[1]{0:T(128)S(6)}', space=smem, size = 0x200, scoped, tag = 'scoped memory for tpu_custom_call.1']
  #allocation3 [shape = 'f32[1]{0:T(128)S(6)}', space=smem, size = 0x200, scoped, tag = 'scoped memory for tpu_custom_call.1']
  %s0 = inlined_call_operand.<no memory space> [shape: s32[1], index: 0, kind: input, shape index: {}]
  %s1 = inlined_call_operand.<no memory space> [shape: f32[1], index: 1, kind: input, shape index: {}]
  %s2 = inlined_call_operand.hbm [shape: f32[32,256], index: 2, kind: input, shape index: {}]
  %s3 = inlined_call_operand.hbm [shape: f32[32,256], index: 3, kind: input, shape index: {}]
  %s4 = inlined_call_operand.hbm [shape: f32[32,256], index: 4, kind: output, shape index: {0}]
  %s5 = inlined_call_operand.hbm [shape: f32[32,256], index: 5, kind: output, shape index: {1}]
  %s6 = inlined_call_operand.hbm [shape: f32[32,256], index: 6, kind: output, shape index: {2}]
  %7 = xla_tuple %s4, %s5, %s6
  %s8 = sld [smem:[#allocation0]]
  $region50: #{tpu_custom_call.1} parent=0
    _
  %s10 = ssub.s32 1, %s8
  %s11 = scalar_select 0, %s10, %s8
  %12 = sst [smem:[#allocation2]] %s0
  %13 = sst [smem:[#allocation3]] %s1
  $region1: #{tpu_custom_call.1} parent=0
    #allocation4 [shape = 'u8[32768]{0}', space=vmem, size = 0x8000, scoped, tag = 'input window, operand 2, single buffered']
    #allocation5 [shape = 's32[1]{0}', space=sflag, size = 0x4, scoped, tag = 'scoped memory for tpu_custom_call.1']
    #allocation6 [shape = 's32[1]{0}', space=sflag, size = 0x4, scoped, tag = 'scoped memory for tpu_custom_call.1']
    #allocation7 [shape = 'u8[32768]{0}', space=vmem, size = 0x8000, scoped, tag = 'input window, operand 3, single buffered']
    #allocation8 [shape = 's32[1]{0}', space=sflag, size = 0x4, scoped, tag = 'scoped memory for tpu_custom_call.1']
    #allocation9 [shape = 'u8[32768]{0}', space=vmem, size = 0x8000, scoped, tag = 'output window, operand 0, single buffered']
    #allocation10 [shape = 'u8[32768]{0}', space=vmem, size = 0x8000, scoped, tag = 'output window, operand 1, single buffered']
    #allocation11 [shape = 's32[1]{0}', space=sflag, size = 0x4, scoped, tag = 'scoped memory for tpu_custom_call.1']
    #allocation12 [shape = 'u8[32768]{0}', space=vmem, size = 0x8000, scoped, tag = 'output window, operand 2, single buffered']
    %14 = vsyncpa [#allocation5], 0
    %15 = vsyncpa [#allocation8], 0
    %16 = vsyncpa [#allocation6], 0
    %17 = vsyncpa [#allocation11], 0
    // Predicated region
    $region2: #{tpu_custom_call.1} parent=1 // pred_check
      _
    $region3: #{tpu_custom_call.1} parent=1 // pred_check_branch
      %19 = sbr.rel (0) target = $region5
    $region4: #{tpu_custom_call.1} parent=1 // pred_region
      _
    $region5: #{tpu_custom_call.1} parent=1 // pred_fallthru
      _
    // Predicated region
    $region6: #{tpu_custom_call.1} parent=1 // pred_check
      _
    $region7: #{tpu_custom_call.1} parent=1 // pred_check_branch
      %21 = sbr.rel (0) target = $region9
    $region8: #{tpu_custom_call.1} parent=1 // pred_region
      _
    $region9: #{tpu_custom_call.1} parent=1 // pred_fallthru
      _
    // Predicated region
    $region10: #{tpu_custom_call.1} parent=1 // pred_check
      _
    $region11: #{tpu_custom_call.1} parent=1 // pred_check_branch
      %23 = sbr.rel (0) target = $region13
    $region12: #{tpu_custom_call.1} parent=1 // pred_region
      %s25 = ssub.s32 1024, 1024
      %26 = vsyncadd [#allocation5], %s25
      %s27 = sshll.u32 [#allocation4], 4
      %s28 = int_to_ptr.vmem [resolvable:$true] %s27
      %33 = dma.hbm_to_vmem [thread:$0]  %s2, 1024, %s28, [#allocation5], 256, 256, 16
    $region13: #{tpu_custom_call.1} parent=1 // pred_fallthru
      _
    // Predicated region
    $region14: #{tpu_custom_call.1} parent=1 // pred_check
      _
    $region15: #{tpu_custom_call.1} parent=1 // pred_check_branch
      %35 = sbr.rel (0) target = $region17
    $region16: #{tpu_custom_call.1} parent=1 // pred_region
      %s37 = ssub.s32 1024, 1024
      %38 = vsyncadd [#allocation8], %s37
      %s39 = sshll.u32 [#allocation7], 4
      %s40 = int_to_ptr.vmem [resolvable:$true] %s39
      %45 = dma.hbm_to_vmem [thread:$0]  %s3, 1024, %s40, [#allocation8], 256, 256, 16
    $region17: #{tpu_custom_call.1} parent=1 // pred_fallthru
      _
    // Predicated region
    $region18: #{tpu_custom_call.1} parent=1 // pred_check
      _
    $region19: #{tpu_custom_call.1} parent=1 // pred_check_branch
      %47 = sbr.rel (0) target = $region21
    $region20: #{tpu_custom_call.1} parent=1 // pred_region
      %48 = dma.done [#allocation5], 1024
    $region21: #{tpu_custom_call.1} parent=1 // pred_fallthru
      _
    // Predicated region
    $region22: #{tpu_custom_call.1} parent=1 // pred_check
      _
    $region23: #{tpu_custom_call.1} parent=1 // pred_check_branch
      %50 = sbr.rel (0) target = $region25
    $region24: #{tpu_custom_call.1} parent=1 // pred_region
      %51 = dma.done [#allocation8], 1024
    $region25: #{tpu_custom_call.1} parent=1 // pred_fallthru
      _
    %s52 = sld [smem:[#allocation2]]
    %s53 = sld [smem:[#allocation3]]
    %v54 = vlaneseq
    %v55 = vshrl.u32 %v54, 7
    %v56 = vadd.s32 %v55, 8
    %v57 = vadd.s32 %v55, 16
    %v58 = vadd.s32 %v55, 24
    %s59 = smul.u32 0, 32
    %v60 = vstv %s59
    %v61 = vadd.s32 %v55, %v60
    %v62 = vadd.s32 %v56, %v60
    %v63 = vadd.s32 %v57, %v60
    %v64 = vadd.s32 %v58, %v60
    %v65 = vlaneseq
    %v66 = vand.u32 %v65, 127
    %v67 = vadd.s32 %v66, 128
    %v68 = vmul.u32 %v61, 256
    %v69 = vmul.u32 %v62, 256
    %v70 = vmul.u32 %v63, 256
    %v71 = vmul.u32 %v64, 256
    %v72 = vadd.s32 %v68, %v66
    %v73 = vadd.s32 %v68, %v67
    %v74 = vadd.s32 %v69, %v66
    %v75 = vadd.s32 %v69, %v67
    %v76 = vadd.s32 %v70, %v66
    %v77 = vadd.s32 %v70, %v67
    %v78 = vadd.s32 %v71, %v66
    %v79 = vadd.s32 %v71, %v67
    %s80 = smul.u32 %s52, 2654435769
    %v81 = vstv %s80
    %v82 = vxor.u32 %v72, %v81
    %v83 = vxor.u32 %v73, %v81
    %v84 = vxor.u32 %v74, %v81
    %v85 = vxor.u32 %v75, %v81
    %v86 = vxor.u32 %v76, %v81
    %v87 = vxor.u32 %v77, %v81
    %v88 = vxor.u32 %v78, %v81
    %v89 = vxor.u32 %v79, %v81
    %v90 = vld [vmem:[#allocation4] sm:$0xff]
    %v91 = vld [vmem:[#allocation4 + $0x8] sm:$0xff]
    %v92 = vld [vmem:[#allocation4 + $0x10] sm:$0xff]
    %v93 = vld [vmem:[#allocation4 + $0x18] sm:$0xff]
    %v94 = vld [vmem:[#allocation4 + $0x20] sm:$0xff]
    %v95 = vld [vmem:[#allocation4 + $0x28] sm:$0xff]
    %v96 = vld [vmem:[#allocation4 + $0x30] sm:$0xff]
    %v97 = vld [vmem:[#allocation4 + $0x38] sm:$0xff]
    %v98 = vmul.f32 %v90, 0.9
    %v99 = vmul.f32 %v91, 0.9
    %v100 = vmul.f32 %v92, 0.9
    %v101 = vmul.f32 %v93, 0.9
    %v102 = vmul.f32 %v94, 0.9
    %v103 = vmul.f32 %v95, 0.9
    %v104 = vmul.f32 %v96, 0.9
    %v105 = vmul.f32 %v97, 0.9
    %v106 = vxor.u32 %v82, 2246822507
    %v107 = vxor.u32 %v83, 2246822507
    %v108 = vxor.u32 %v84, 2246822507
    %v109 = vxor.u32 %v85, 2246822507
    %v110 = vxor.u32 %v86, 2246822507
    %v111 = vxor.u32 %v87, 2246822507
    %v112 = vxor.u32 %v88, 2246822507
    %v113 = vxor.u32 %v89, 2246822507
    %v114 = vshrl.u32 %v106, 16
    %v115 = vshrl.u32 %v107, 16
    %v116 = vshrl.u32 %v108, 16
    %v117 = vshrl.u32 %v109, 16
    %v118 = vshrl.u32 %v110, 16
    %v119 = vshrl.u32 %v111, 16
    %v120 = vshrl.u32 %v112, 16
    %v121 = vshrl.u32 %v113, 16
    %v122 = vxor.u32 %v106, %v114
    %v123 = vxor.u32 %v107, %v115
    %v124 = vxor.u32 %v108, %v116
    %v125 = vxor.u32 %v109, %v117
    %v126 = vxor.u32 %v110, %v118
    %v127 = vxor.u32 %v111, %v119
    %v128 = vxor.u32 %v112, %v120
    %v129 = vxor.u32 %v113, %v121
    %v130 = vmul.u32 %v122, 2146121005
    %v131 = vmul.u32 %v123, 2146121005
    %v132 = vmul.u32 %v124, 2146121005
    %v133 = vmul.u32 %v125, 2146121005
    %v134 = vmul.u32 %v126, 2146121005
    %v135 = vmul.u32 %v127, 2146121005
    %v136 = vmul.u32 %v128, 2146121005
    %v137 = vmul.u32 %v129, 2146121005
    %v138 = vshrl.u32 %v130, 15
    %v139 = vshrl.u32 %v131, 15
    %v140 = vshrl.u32 %v132, 15
    %v141 = vshrl.u32 %v133, 15
    %v142 = vshrl.u32 %v134, 15
    %v143 = vshrl.u32 %v135, 15
    %v144 = vshrl.u32 %v136, 15
    %v145 = vshrl.u32 %v137, 15
    %v146 = vxor.u32 %v130, %v138
    %v147 = vxor.u32 %v131, %v139
    %v148 = vxor.u32 %v132, %v140
    %v149 = vxor.u32 %v133, %v141
    %v150 = vxor.u32 %v134, %v142
    %v151 = vxor.u32 %v135, %v143
    %v152 = vxor.u32 %v136, %v144
    %v153 = vxor.u32 %v137, %v145
    %v154 = vmul.u32 %v146, 2221713035
    %v155 = vmul.u32 %v147, 2221713035
    %v156 = vmul.u32 %v148, 2221713035
    %v157 = vmul.u32 %v149, 2221713035
    %v158 = vmul.u32 %v150, 2221713035
    %v159 = vmul.u32 %v151, 2221713035
    %v160 = vmul.u32 %v152, 2221713035
    %v161 = vmul.u32 %v153, 2221713035
    %v162 = vshrl.u32 %v154, 16
    %v163 = vshrl.u32 %v155, 16
    %v164 = vshrl.u32 %v156, 16
    %v165 = vshrl.u32 %v157, 16
    %v166 = vshrl.u32 %v158, 16
    %v167 = vshrl.u32 %v159, 16
    %v168 = vshrl.u32 %v160, 16
    %v169 = vshrl.u32 %v161, 16
    %v170 = vxor.u32 %v154, %v162
    %v171 = vxor.u32 %v155, %v163
    %v172 = vxor.u32 %v156, %v164
    %v173 = vxor.u32 %v157, %v165
    %v174 = vxor.u32 %v158, %v166
    %v175 = vxor.u32 %v159, %v167
    %v176 = vxor.u32 %v160, %v168
    %v177 = vxor.u32 %v161, %v169
    %v178 = vand.u32 %v170, 8388607
    %v179 = vand.u32 %v171, 8388607
    %v180 = vand.u32 %v172, 8388607
    %v181 = vand.u32 %v173, 8388607
    %v182 = vand.u32 %v174, 8388607
    %v183 = vand.u32 %v175, 8388607
    %v184 = vand.u32 %v176, 8388607
    %v185 = vand.u32 %v177, 8388607
    %v186 = vcvt.s32.f32 %v178
    %v187 = vcvt.s32.f32 %v179
    %v188 = vcvt.s32.f32 %v180
    %v189 = vcvt.s32.f32 %v181
    %v190 = vcvt.s32.f32 %v182
    %v191 = vcvt.s32.f32 %v183
    %v192 = vcvt.s32.f32 %v184
    %v193 = vcvt.s32.f32 %v185
    %v194 = vmul.f32 %v186, 1.1920929e-08
    %v195 = vmul.f32 %v187, 1.1920929e-08
    %v196 = vmul.f32 %v188, 1.1920929e-08
    %v197 = vmul.f32 %v189, 1.1920929e-08
    %v198 = vmul.f32 %v190, 1.1920929e-08
    %v199 = vmul.f32 %v191, 1.1920929e-08
    %v200 = vmul.f32 %v192, 1.1920929e-08
    %v201 = vmul.f32 %v193, 1.1920929e-08
    %v202 = vadd.f32 %v98, %v194
    %v203 = vadd.f32 %v99, %v195
    %v204 = vadd.f32 %v100, %v196
    %v205 = vadd.f32 %v101, %v197
    %v206 = vadd.f32 %v102, %v198
    %v207 = vadd.f32 %v103, %v199
    %v208 = vadd.f32 %v104, %v200
    %v209 = vadd.f32 %v105, %v201
    %210 = vst [vmem:[#allocation9] sm:$0xff] %v202
    %211 = vst [vmem:[#allocation9 + $0x8] sm:$0xff] %v203
    %212 = vst [vmem:[#allocation9 + $0x10] sm:$0xff] %v204
    %213 = vst [vmem:[#allocation9 + $0x18] sm:$0xff] %v205
    %214 = vst [vmem:[#allocation9 + $0x20] sm:$0xff] %v206
    %215 = vst [vmem:[#allocation9 + $0x28] sm:$0xff] %v207
    %216 = vst [vmem:[#allocation9 + $0x30] sm:$0xff] %v208
    %217 = vst [vmem:[#allocation9 + $0x38] sm:$0xff] %v209
    %v218 = vld [vmem:[#allocation7] sm:$0xff]
    %v219 = vld [vmem:[#allocation7 + $0x8] sm:$0xff]
    %v220 = vld [vmem:[#allocation7 + $0x10] sm:$0xff]
    %v221 = vld [vmem:[#allocation7 + $0x18] sm:$0xff]
    %v222 = vld [vmem:[#allocation7 + $0x20] sm:$0xff]
    %v223 = vld [vmem:[#allocation7 + $0x28] sm:$0xff]
    %v224 = vld [vmem:[#allocation7 + $0x30] sm:$0xff]
    %v225 = vld [vmem:[#allocation7 + $0x38] sm:$0xff]
    %v226 = vmul.f32 %v218, 0.9
    %v227 = vmul.f32 %v219, 0.9
    %v228 = vmul.f32 %v220, 0.9
    %v229 = vmul.f32 %v221, 0.9
    %v230 = vmul.f32 %v222, 0.9
    %v231 = vmul.f32 %v223, 0.9
    %v232 = vmul.f32 %v224, 0.9
    %v233 = vmul.f32 %v225, 0.9
    %v234 = vxor.u32 %v82, 3266489909
    %v235 = vxor.u32 %v83, 3266489909
    %v236 = vxor.u32 %v84, 3266489909
    %v237 = vxor.u32 %v85, 3266489909
    %v238 = vxor.u32 %v86, 3266489909
    %v239 = vxor.u32 %v87, 3266489909
    %v240 = vxor.u32 %v88, 3266489909
    %v241 = vxor.u32 %v89, 3266489909
    %v242 = vshrl.u32 %v234, 16
    %v243 = vshrl.u32 %v235, 16
    %v244 = vshrl.u32 %v236, 16
    %v245 = vshrl.u32 %v237, 16
    %v246 = vshrl.u32 %v238, 16
    %v247 = vshrl.u32 %v239, 16
    %v248 = vshrl.u32 %v240, 16
    %v249 = vshrl.u32 %v241, 16
    %v250 = vxor.u32 %v234, %v242
    %v251 = vxor.u32 %v235, %v243
    %v252 = vxor.u32 %v236, %v244
    %v253 = vxor.u32 %v237, %v245
    %v254 = vxor.u32 %v238, %v246
    %v255 = vxor.u32 %v239, %v247
    %v256 = vxor.u32 %v240, %v248
    %v257 = vxor.u32 %v241, %v249
    %v258 = vmul.u32 %v250, 2146121005
    %v259 = vmul.u32 %v251, 2146121005
    %v260 = vmul.u32 %v252, 2146121005
    %v261 = vmul.u32 %v253, 2146121005
    %v262 = vmul.u32 %v254, 2146121005
    %v263 = vmul.u32 %v255, 2146121005
    %v264 = vmul.u32 %v256, 2146121005
    %v265 = vmul.u32 %v257, 2146121005
    %v266 = vshrl.u32 %v258, 15
    %v267 = vshrl.u32 %v259, 15
    %v268 = vshrl.u32 %v260, 15
    %v269 = vshrl.u32 %v261, 15
    %v270 = vshrl.u32 %v262, 15
    %v271 = vshrl.u32 %v263, 15
    %v272 = vshrl.u32 %v264, 15
    %v273 = vshrl.u32 %v265, 15
    %v274 = vxor.u32 %v258, %v266
    %v275 = vxor.u32 %v259, %v267
    %v276 = vxor.u32 %v260, %v268
    %v277 = vxor.u32 %v261, %v269
    %v278 = vxor.u32 %v262, %v270
    %v279 = vxor.u32 %v263, %v271
    %v280 = vxor.u32 %v264, %v272
    %v281 = vxor.u32 %v265, %v273
    %v282 = vmul.u32 %v274, 2221713035
    %v283 = vmul.u32 %v275, 2221713035
    %v284 = vmul.u32 %v276, 2221713035
    %v285 = vmul.u32 %v277, 2221713035
    %v286 = vmul.u32 %v278, 2221713035
    %v287 = vmul.u32 %v279, 2221713035
    %v288 = vmul.u32 %v280, 2221713035
    %v289 = vmul.u32 %v281, 2221713035
    %v290 = vshrl.u32 %v282, 16
    %v291 = vshrl.u32 %v283, 16
    %v292 = vshrl.u32 %v284, 16
    %v293 = vshrl.u32 %v285, 16
    %v294 = vshrl.u32 %v286, 16
    %v295 = vshrl.u32 %v287, 16
    %v296 = vshrl.u32 %v288, 16
    %v297 = vshrl.u32 %v289, 16
    %v298 = vxor.u32 %v282, %v290
    %v299 = vxor.u32 %v283, %v291
    %v300 = vxor.u32 %v284, %v292
    %v301 = vxor.u32 %v285, %v293
    %v302 = vxor.u32 %v286, %v294
    %v303 = vxor.u32 %v287, %v295
    %v304 = vxor.u32 %v288, %v296
    %v305 = vxor.u32 %v289, %v297
    %v306 = vand.u32 %v298, 8388607
    %v307 = vand.u32 %v299, 8388607
    %v308 = vand.u32 %v300, 8388607
    %v309 = vand.u32 %v301, 8388607
    %v310 = vand.u32 %v302, 8388607
    %v311 = vand.u32 %v303, 8388607
    %v312 = vand.u32 %v304, 8388607
    %v313 = vand.u32 %v305, 8388607
    %v314 = vcvt.s32.f32 %v306
    %v315 = vcvt.s32.f32 %v307
    %v316 = vcvt.s32.f32 %v308
    %v317 = vcvt.s32.f32 %v309
    %v318 = vcvt.s32.f32 %v310
    %v319 = vcvt.s32.f32 %v311
    %v320 = vcvt.s32.f32 %v312
    %v321 = vcvt.s32.f32 %v313
    %v322 = vmul.f32 %v314, 1.1920929e-08
    %v323 = vmul.f32 %v315, 1.1920929e-08
    %v324 = vmul.f32 %v316, 1.1920929e-08
    %v325 = vmul.f32 %v317, 1.1920929e-08
    %v326 = vmul.f32 %v318, 1.1920929e-08
    %v327 = vmul.f32 %v319, 1.1920929e-08
    %v328 = vmul.f32 %v320, 1.1920929e-08
    %v329 = vmul.f32 %v321, 1.1920929e-08
    %v330 = vadd.f32 %v226, %v322
    %v331 = vadd.f32 %v227, %v323
    %v332 = vadd.f32 %v228, %v324
    %v333 = vadd.f32 %v229, %v325
    %v334 = vadd.f32 %v230, %v326
    %v335 = vadd.f32 %v231, %v327
    %v336 = vadd.f32 %v232, %v328
    %v337 = vadd.f32 %v233, %v329
    %338 = vst [vmem:[#allocation10] sm:$0xff] %v330
    %339 = vst [vmem:[#allocation10 + $0x8] sm:$0xff] %v331
    %340 = vst [vmem:[#allocation10 + $0x10] sm:$0xff] %v332
    %341 = vst [vmem:[#allocation10 + $0x18] sm:$0xff] %v333
    %342 = vst [vmem:[#allocation10 + $0x20] sm:$0xff] %v334
    %343 = vst [vmem:[#allocation10 + $0x28] sm:$0xff] %v335
    %344 = vst [vmem:[#allocation10 + $0x30] sm:$0xff] %v336
    %345 = vst [vmem:[#allocation10 + $0x38] sm:$0xff] %v337
    %v346 = vstv %s53
    %v347 = vmul.f32 %v346, %v98
    %v348 = vmul.f32 %v346, %v99
    %v349 = vmul.f32 %v346, %v100
    %v350 = vmul.f32 %v346, %v101
    %v351 = vmul.f32 %v346, %v102
    %v352 = vmul.f32 %v346, %v103
    %v353 = vmul.f32 %v346, %v104
    %v354 = vmul.f32 %v346, %v105
    %s355 = ssub.f32 1.0, %s53
    %v356 = vstv %s355
    %v357 = vmul.f32 %v356, %v226
    %v358 = vmul.f32 %v356, %v227
    %v359 = vmul.f32 %v356, %v228
    %v360 = vmul.f32 %v356, %v229
    %v361 = vmul.f32 %v356, %v230
    %v362 = vmul.f32 %v356, %v231
    %v363 = vmul.f32 %v356, %v232
    %v364 = vmul.f32 %v356, %v233
    %v365 = vadd.f32 %v347, %v357
    %v366 = vadd.f32 %v348, %v358
    %v367 = vadd.f32 %v349, %v359
    %v368 = vadd.f32 %v350, %v360
    %v369 = vadd.f32 %v351, %v361
    %v370 = vadd.f32 %v352, %v362
    %v371 = vadd.f32 %v353, %v363
    %v372 = vadd.f32 %v354, %v364
    %v373 = vxor.u32 %v82, 668265263
    %v374 = vxor.u32 %v83, 668265263
    %v375 = vxor.u32 %v84, 668265263
    %v376 = vxor.u32 %v85, 668265263
    %v377 = vxor.u32 %v86, 668265263
    %v378 = vxor.u32 %v87, 668265263
    %v379 = vxor.u32 %v88, 668265263
    %v380 = vxor.u32 %v89, 668265263
    %v381 = vshrl.u32 %v373, 16
    %v382 = vshrl.u32 %v374, 16
    %v383 = vshrl.u32 %v375, 16
    %v384 = vshrl.u32 %v376, 16
    %v385 = vshrl.u32 %v377, 16
    %v386 = vshrl.u32 %v378, 16
    %v387 = vshrl.u32 %v379, 16
    %v388 = vshrl.u32 %v380, 16
    %v389 = vxor.u32 %v373, %v381
    %v390 = vxor.u32 %v374, %v382
    %v391 = vxor.u32 %v375, %v383
    %v392 = vxor.u32 %v376, %v384
    %v393 = vxor.u32 %v377, %v385
    %v394 = vxor.u32 %v378, %v386
    %v395 = vxor.u32 %v379, %v387
    %v396 = vxor.u32 %v380, %v388
    %v397 = vmul.u32 %v389, 2146121005
    %v398 = vmul.u32 %v390, 2146121005
    %v399 = vmul.u32 %v391, 2146121005
    %v400 = vmul.u32 %v392, 2146121005
    %v401 = vmul.u32 %v393, 2146121005
    %v402 = vmul.u32 %v394, 2146121005
    %v403 = vmul.u32 %v395, 2146121005
    %v404 = vmul.u32 %v396, 2146121005
    %v405 = vshrl.u32 %v397, 15
    %v406 = vshrl.u32 %v398, 15
    %v407 = vshrl.u32 %v399, 15
    %v408 = vshrl.u32 %v400, 15
    %v409 = vshrl.u32 %v401, 15
    %v410 = vshrl.u32 %v402, 15
    %v411 = vshrl.u32 %v403, 15
    %v412 = vshrl.u32 %v404, 15
    %v413 = vxor.u32 %v397, %v405
    %v414 = vxor.u32 %v398, %v406
    %v415 = vxor.u32 %v399, %v407
    %v416 = vxor.u32 %v400, %v408
    %v417 = vxor.u32 %v401, %v409
    %v418 = vxor.u32 %v402, %v410
    %v419 = vxor.u32 %v403, %v411
    %v420 = vxor.u32 %v404, %v412
    %v421 = vmul.u32 %v413, 2221713035
    %v422 = vmul.u32 %v414, 2221713035
    %v423 = vmul.u32 %v415, 2221713035
    %v424 = vmul.u32 %v416, 2221713035
    %v425 = vmul.u32 %v417, 2221713035
    %v426 = vmul.u32 %v418, 2221713035
    %v427 = vmul.u32 %v419, 2221713035
    %v428 = vmul.u32 %v420, 2221713035
    %v429 = vshrl.u32 %v421, 16
    %v430 = vshrl.u32 %v422, 16
    %v431 = vshrl.u32 %v423, 16
    %v432 = vshrl.u32 %v424, 16
    %v433 = vshrl.u32 %v425, 16
    %v434 = vshrl.u32 %v426, 16
    %v435 = vshrl.u32 %v427, 16
    %v436 = vshrl.u32 %v428, 16
    %v437 = vxor.u32 %v421, %v429
    %v438 = vxor.u32 %v422, %v430
    %v439 = vxor.u32 %v423, %v431
    %v440 = vxor.u32 %v424, %v432
    %v441 = vxor.u32 %v425, %v433
    %v442 = vxor.u32 %v426, %v434
    %v443 = vxor.u32 %v427, %v435
    %v444 = vxor.u32 %v428, %v436
    %v445 = vand.u32 %v437, 8388607
    %v446 = vand.u32 %v438, 8388607
    %v447 = vand.u32 %v439, 8388607
    %v448 = vand.u32 %v440, 8388607
    %v449 = vand.u32 %v441, 8388607
    %v450 = vand.u32 %v442, 8388607
    %v451 = vand.u32 %v443, 8388607
    %v452 = vand.u32 %v444, 8388607
    %v453 = vcvt.s32.f32 %v445
    %v454 = vcvt.s32.f32 %v446
    %v455 = vcvt.s32.f32 %v447
    %v456 = vcvt.s32.f32 %v448
    %v457 = vcvt.s32.f32 %v449
    %v458 = vcvt.s32.f32 %v450
    %v459 = vcvt.s32.f32 %v451
    %v460 = vcvt.s32.f32 %v452
    %v461 = vmul.f32 %v453, 1.1920929e-08
    %v462 = vmul.f32 %v454, 1.1920929e-08
    %v463 = vmul.f32 %v455, 1.1920929e-08
    %v464 = vmul.f32 %v456, 1.1920929e-08
    %v465 = vmul.f32 %v457, 1.1920929e-08
    %v466 = vmul.f32 %v458, 1.1920929e-08
    %v467 = vmul.f32 %v459, 1.1920929e-08
    %v468 = vmul.f32 %v460, 1.1920929e-08
    %v469 = vadd.f32 %v365, %v461
    %v470 = vadd.f32 %v366, %v462
    %v471 = vadd.f32 %v367, %v463
    %v472 = vadd.f32 %v368, %v464
    %v473 = vadd.f32 %v369, %v465
    %v474 = vadd.f32 %v370, %v466
    %v475 = vadd.f32 %v371, %v467
    %v476 = vadd.f32 %v372, %v468
    %477 = vst [vmem:[#allocation12] sm:$0xff] %v469
    %478 = vst [vmem:[#allocation12 + $0x8] sm:$0xff] %v470
    %479 = vst [vmem:[#allocation12 + $0x10] sm:$0xff] %v471
    %480 = vst [vmem:[#allocation12 + $0x18] sm:$0xff] %v472
    %481 = vst [vmem:[#allocation12 + $0x20] sm:$0xff] %v473
    %482 = vst [vmem:[#allocation12 + $0x28] sm:$0xff] %v474
    %483 = vst [vmem:[#allocation12 + $0x30] sm:$0xff] %v475
    %484 = vst [vmem:[#allocation12 + $0x38] sm:$0xff] %v476
    // Predicated region
    $region26: #{tpu_custom_call.1} parent=1 // pred_check
      _
    $region27: #{tpu_custom_call.1} parent=1 // pred_check_branch
      %486 = sbr.rel (0) target = $region29
    $region28: #{tpu_custom_call.1} parent=1 // pred_region
      %s488 = ssub.s32 1024, 1024
      %489 = vsyncadd [#allocation6], %s488
      %s490 = sshll.u32 [#allocation9], 4
      %s491 = int_to_ptr.vmem [resolvable:$true] %s490
      %496 = dma.vmem_to_hbm [thread:$0]  %s491, 1024, %s4, [#allocation6], 256, 256, 16
    $region29: #{tpu_custom_call.1} parent=1 // pred_fallthru
      _
    // Predicated region
    $region30: #{tpu_custom_call.1} parent=1 // pred_check
      _
    $region31: #{tpu_custom_call.1} parent=1 // pred_check_branch
      %498 = sbr.rel (0) target = $region33
    $region32: #{tpu_custom_call.1} parent=1 // pred_region
      %s500 = ssub.s32 1024, 1024
      %501 = vsyncadd [#allocation11], %s500
      %s502 = sshll.u32 [#allocation10], 4
      %s503 = int_to_ptr.vmem [resolvable:$true] %s502
      %508 = dma.vmem_to_hbm [thread:$0]  %s503, 1024, %s5, [#allocation11], 256, 256, 16
    $region33: #{tpu_custom_call.1} parent=1 // pred_fallthru
      _
    // Predicated region
    $region34: #{tpu_custom_call.1} parent=1 // pred_check
      _
    $region35: #{tpu_custom_call.1} parent=1 // pred_check_branch
      %510 = sbr.rel (0) target = $region37
    $region36: #{tpu_custom_call.1} parent=1 // pred_region
      %s512 = ssub.s32 1024, 1024
      %513 = vsyncadd [#allocation11], %s512
      %s514 = sshll.u32 [#allocation12], 4
      %s515 = int_to_ptr.vmem [resolvable:$true] %s514
      %520 = dma.vmem_to_hbm [thread:$0]  %s515, 1024, %s6, [#allocation11], 256, 256, 16
    $region37: #{tpu_custom_call.1} parent=1 // pred_fallthru
      _
    // Predicated region
    $region38: #{tpu_custom_call.1} parent=1 // pred_check
      _
    $region39: #{tpu_custom_call.1} parent=1 // pred_check_branch
      %522 = sbr.rel (0) target = $region41
    $region40: #{tpu_custom_call.1} parent=1 // pred_region
      %523 = dma.done [#allocation6], 1024
    $region41: #{tpu_custom_call.1} parent=1 // pred_fallthru
      _
    // Predicated region
    $region42: #{tpu_custom_call.1} parent=1 // pred_check
      _
    $region43: #{tpu_custom_call.1} parent=1 // pred_check_branch
      %525 = sbr.rel (0) target = $region45
    $region44: #{tpu_custom_call.1} parent=1 // pred_region
      %526 = dma.done [#allocation11], 1024
    $region45: #{tpu_custom_call.1} parent=1 // pred_fallthru
      _
    // Predicated region
    $region46: #{tpu_custom_call.1} parent=1 // pred_check
      _
    $region47: #{tpu_custom_call.1} parent=1 // pred_check_branch
      %528 = sbr.rel (0) target = $region49
    $region48: #{tpu_custom_call.1} parent=1 // pred_region
      %529 = dma.done [#allocation11], 1024
    $region49: #{tpu_custom_call.1} parent=1 // pred_fallthru
      _
    %530 = vsyncpa [#allocation5], 1
    %531 = vsyncpa [#allocation8], 1
    %532 = vsyncpa [#allocation6], 1
    %533 = vsyncpa [#allocation11], 1

</llo_original>
